<compile_context>
chip_gen: v7x
topology: tpu7x:2x2x1
jax: 0.10.0
libtpu: 0.0.40
codegen_flags: <defaults>
</compile_context>

<pallas_src>
import functools

import jax
import jax.numpy as jnp
from jax import lax
from jax.experimental import pallas as pl
from jax.experimental.pallas import tpu as pltpu

LANE = 128      # vreg lane width
SUBLANE = 8     # f32 sublanes per vreg
OUT_W = 128     # lane-dense output slab width


def _round_up(x, m):
    return (x + m - 1) // m * m


def _w2v_kernel(idx_ref, c_tbl_ref, ctx_tbl_t_ref, out_ref, *, num_neg):
    """One batch tile of the skip-gram + negative-sampling forward.

    idx_ref       : (TB, K+2) int32 -- col 0: center, col 1: context, cols 2..: negatives
    c_tbl_ref     : (Vp, Dp)  f32   -- zero-padded center table (single VMEM copy)
    ctx_tbl_t_ref : (Dp, Vp)  f32   -- zero-padded, transposed context table
    out_ref       : (TB, 128) f32   -- col 0: pos score, cols 1..K: neg scores, rest 0
    """
    idx = idx_ref[...]
    c_tbl = c_tbl_ref[...]
    ctx_t = ctx_tbl_t_ref[...]

    tb = idx.shape[0]
    vp = c_tbl.shape[0]
    out_w = out_ref.shape[-1]

    iota_v = lax.broadcasted_iota(jnp.int32, (tb, vp), 1)

    # MXU matmul #1: gather the TB center embeddings with a one-hot matmul.
    center_oh = (iota_v == idx[:, 0:1]).astype(c_tbl.dtype)             # (TB, Vp)
    center = jnp.dot(center_oh, c_tbl,
                     preferred_element_type=jnp.float32)                # (TB, Dp)

    # MXU matmul #2: score of every (padded) context-table row against each center.
    #   scores[b, v] = <center_b, context_table_v>  (exactly 0 for padded rows).
    scores = jnp.dot(center, ctx_t,
                     preferred_element_type=jnp.float32)                # (TB, Vp)

    # Extract the K+1 needed scores (context + negatives) with one-hot lane masks and
    # pack them into a single lane-dense (TB, 128) slab -> ONE unmasked store.
    lane = lax.broadcasted_iota(jnp.int32, (tb, out_w), 1)
    out = jnp.zeros((tb, out_w), jnp.float32)
    for j in range(1 + num_neg):                   # j == 0: context, j >= 1: negatives
        sel = (iota_v == idx[:, 1 + j:2 + j]).astype(jnp.float32)       # (TB, Vp)
        s = jnp.sum(sel * scores, axis=-1, keepdims=True)               # (TB, 1)
        s = s if j == 0 else -s                    # torch: neg_embeds.neg() @ center
        out = out + s * (lane == j).astype(jnp.float32)
    out_ref[...] = out                             # single lane-dense store


class Word2VecPallas:
    """Pallas-TPU analogue of the torch Word2Vec module (forward pass only)."""

    def __init__(self, center_table, context_table):
        center_table = jnp.asarray(center_table, jnp.float32)
        context_table = jnp.asarray(context_table, jnp.float32)
        V, D = center_table.shape
        self.V, self.D = int(V), int(D)
        self.center_table = center_table
        self.context_table = context_table

        # Pad / transpose ONCE (hoisted out of the per-call path).
        self.Vp = _round_up(max(self.V, 1), LANE)
        self.Dp = _round_up(max(self.D, 1), LANE)
        self.c_tbl = (jnp.zeros((self.Vp, self.Dp), jnp.float32)
                      .at[:self.V, :self.D].set(center_table))
        self.ctx_tbl_t = (jnp.zeros((self.Dp, self.Vp), jnp.float32)
                          .at[:self.D, :self.V].set(context_table.T))

    def forward(self, center_words, context_words, neg_samples):
        # NOTE: like torch nn.Embedding, indices are assumed in-range (not clamped).
        center_words = jnp.asarray(center_words, jnp.int32).reshape(-1)
        context_words = jnp.asarray(context_words, jnp.int32).reshape(-1)
        neg_samples = jnp.asarray(neg_samples, jnp.int32)
        B = int(center_words.shape[0])
        K = int(neg_samples.shape[1])
        assert K + 1 <= OUT_W, "output slab assumes K + 1 <= 128"

        # ---- batch tiling ----
        B8 = _round_up(max(B, 1), SUBLANE)
        if B8 <= 256:
            TB = B8                                     # single step; tiles are tiny
        else:
            # >= 2 grid steps (feeds megacore / both v7x TensorCores), TB <= 512.
            TB = min(512, _round_up(pl.cdiv(B8, 2), SUBLANE))
        B_pad = _round_up(B8, TB)
        grid = (B_pad // TB,)

        # Narrow (B_pad, K+2) int32 index slab: col0 center, col1 context, cols2.. negs.
        idx = jnp.zeros((B_pad, K + 2), jnp.int32)
        idx = idx.at[:B, 0].set(center_words)
        idx = idx.at[:B, 1].set(context_words)
        idx = idx.at[:B, 2:].set(neg_samples)

        Vp, Dp = self.Vp, self.Dp
        flops = (2 * B_pad * Vp * Dp            # center one-hot gather matmul
                 + 2 * B_pad * Dp * Vp          # score matmul
                 + 3 * B_pad * (K + 1) * Vp)    # mask extraction
        bytes_accessed = (idx.size * 4 + self.c_tbl.size * 4
                          + self.ctx_tbl_t.size * 4 + B_pad * OUT_W * 4)

        out_padded = pl.pallas_call(
            functools.partial(_w2v_kernel, num_neg=K),
            out_shape=jax.ShapeDtypeStruct((B_pad, OUT_W), jnp.float32),
            grid_spec=pltpu.PrefetchScalarGridSpec(
                num_scalar_prefetch=0,
                grid=grid,
                in_specs=[
                    # Per-tile index slab (blocked, pipelined).
                    pl.BlockSpec((TB, K + 2), lambda i: (i, 0)),
                    # Embedding tables: whole array, single VMEM copy (not pipelined,
                    # so no double buffering and no per-step re-DMA).
                    pl.BlockSpec(memory_space=pltpu.MemorySpace.VMEM),
                    pl.BlockSpec(memory_space=pltpu.MemorySpace.VMEM),
                ],
                out_specs=pl.BlockSpec((TB, OUT_W), lambda i: (i, 0)),
            ),
            compiler_params=pltpu.CompilerParams(
                dimension_semantics=("parallel",),
                vmem_limit_bytes=32 * 1024 * 1024,   # safe on v5e/v6e (128 MiB) & v7x (64 MiB)
            ),
            cost_estimate=pl.CostEstimate(
                flops=flops, transcendentals=0, bytes_accessed=bytes_accessed),
        )(idx, self.c_tbl, self.ctx_tbl_t)

        pos_scores = out_padded[:B, 0]            # (B,)   == torch .squeeze()
        neg_scores = out_padded[:B, 1:1 + K]      # (B, K)
        return pos_scores, neg_scores


def reference_forward(center_words, context_words, neg_samples,
                      center_table, context_table):
    center = center_table[center_words]                        # (B, D)
    context = context_table[context_words]                     # (B, D)
    neg = context_table[neg_samples]                           # (B, K, D)
    pos_scores = jnp.sum(context * center, axis=-1)            # (B,)
    neg_scores = -jnp.sum(neg * center[:, None, :], axis=-1)   # (B, K)
    return pos_scores, neg_scores


if __name__ == "__main__":
    # Small synthetic shapes consistent with the module (jieba vocab prep is host-side).
    vocab_size = 24
    embedding_dim = 100      # module's embedding_dim
    B = 8                    # batch of (center, context) pairs
    K = 5                    # negative samples per pair

    key = jax.random.PRNGKey(0)
    k_ce, k_ct, k_c, k_x, k_n = jax.random.split(key, 5)

    # nn.Embedding default init: N(0, 1).  Values are snapped to bf16-representable
    # f32 so the result is insensitive to the MXU's f32-matmul pass count and the
    # comparison against the pure-f32 reference stays tight.
    center_table = jax.random.normal(
        k_ce, (vocab_size, embedding_dim), jnp.float32
    ).astype(jnp.bfloat16).astype(jnp.float32)
    context_table = jax.random.normal(
        k_ct, (vocab_size, embedding_dim), jnp.float32
    ).astype(jnp.bfloat16).astype(jnp.float32)

    center_words = jax.random.randint(k_c, (B,), 0, vocab_size, jnp.int32)
    context_words = jax.random.randint(k_x, (B,), 0, vocab_size, jnp.int32)
    neg_samples = jax.random.randint(k_n, (B, K), 0, vocab_size, jnp.int32)

    model = Word2VecPallas(center_table, context_table)
    pos_scores, neg_scores = model.forward(center_words, context_words, neg_samples)
    jax.block_until_ready((pos_scores, neg_scores))

    ref_pos, ref_neg = reference_forward(center_words, context_words, neg_samples,
                                         center_table, context_table)

    assert pos_scores.shape == (B,) and neg_scores.shape == (B, K)
    assert jnp.allclose(pos_scores, ref_pos, atol=1e-4, rtol=1e-4)
    assert jnp.allclose(neg_scores, ref_neg, atol=1e-4, rtol=1e-4)

    print("KERNEL_OK")
</pallas_src>

<mosaic_0001>
module attributes {stable_mosaic.version = 11 : i64} {
  func.func @_w2v_kernel(%arg0: i32, %arg1: memref<8x7xi32, #tpu.memory_space<vmem>>, %arg2: memref<128x128xf32, #tpu.memory_space<vmem>>, %arg3: memref<128x128xf32, #tpu.memory_space<vmem>>, %arg4: memref<8x128xf32, #tpu.memory_space<vmem>>) attributes {dimension_semantics = [#tpu.dimension_semantics<parallel>], iteration_bounds = array<i64: 1>, scalar_prefetch = 0 : i64, scratch_operands = 0 : i64, tpu.core_type = #tpu.core_type<tc>, window_params = [{transform_indices = @transform_0, window_bounds = array<i64: 8, 7>}, {pipeline_mode = #tpu.pipeline_mode<synchronous>, transform_indices = @transform_1, window_bounds = array<i64: 128, 128>}, {pipeline_mode = #tpu.pipeline_mode<synchronous>, transform_indices = @transform_2, window_bounds = array<i64: 128, 128>}, {transform_indices = @transform_3, window_bounds = array<i64: 8, 128>}]} {
    %c0 = arith.constant 0 : index
    %c0_0 = arith.constant 0 : index
    %0 = vector.load %arg1[%c0, %c0_0] : memref<8x7xi32, #tpu.memory_space<vmem>>, vector<8x7xi32>
    %c0_1 = arith.constant 0 : index
    %c0_2 = arith.constant 0 : index
    %1 = vector.load %arg2[%c0_1, %c0_2] : memref<128x128xf32, #tpu.memory_space<vmem>>, vector<128x128xf32>
    %c0_3 = arith.constant 0 : index
    %c0_4 = arith.constant 0 : index
    %2 = vector.load %arg3[%c0_3, %c0_4] : memref<128x128xf32, #tpu.memory_space<vmem>>, vector<128x128xf32>
    %3 = tpu.iota {dimensions = array<i32: 1>} : vector<8x128xi32>
    %4 = vector.extract_strided_slice %0 {offsets = [0, 0], sizes = [8, 1], strides = [1, 1]} : vector<8x7xi32> to vector<8x1xi32>
    %5 = vector.broadcast %4 : vector<8x1xi32> to vector<8x128xi32>
    %6 = arith.cmpi eq, %3, %5 : vector<8x128xi32>
    %7 = arith.extui %6 : vector<8x128xi1> to vector<8x128xi32>
    %8 = arith.sitofp %7 : vector<8x128xi32> to vector<8x128xf32>
    %cst = arith.constant dense<0.000000e+00> : vector<8x128xf32>
    %9 = tpu.matmul %8, %1, %cst {dimension_numbers = #tpu.dot_dimension_numbers<[1], [0], [0], [1], [0, 0, 1, 1], [], []>} : vector<8x128xf32>, vector<128x128xf32>, vector<8x128xf32> -> vector<8x128xf32>
    %cst_5 = arith.constant dense<0.000000e+00> : vector<8x128xf32>
    %10 = tpu.matmul %9, %2, %cst_5 {dimension_numbers = #tpu.dot_dimension_numbers<[1], [0], [0], [1], [0, 0, 1, 1], [], []>} : vector<8x128xf32>, vector<128x128xf32>, vector<8x128xf32> -> vector<8x128xf32>
    %11 = tpu.iota {dimensions = array<i32: 1>} : vector<8x128xi32>
    %cst_6 = arith.constant 0.000000e+00 : f32
    %12 = vector.broadcast %cst_6 : f32 to vector<8x128xf32>
    %13 = vector.extract_strided_slice %0 {offsets = [0, 1], sizes = [8, 1], strides = [1, 1]} : vector<8x7xi32> to vector<8x1xi32>
    %14 = vector.broadcast %13 : vector<8x1xi32> to vector<8x128xi32>
    %15 = arith.cmpi eq, %3, %14 : vector<8x128xi32>
    %16 = arith.extui %15 : vector<8x128xi1> to vector<8x128xi32>
    %17 = arith.sitofp %16 : vector<8x128xi32> to vector<8x128xf32>
    %18 = arith.mulf %17, %10 : vector<8x128xf32>
    %cst_7 = arith.constant dense<0.000000e+00> : vector<8xf32>
    %19 = vector.multi_reduction <add>, %18, %cst_7 [1] : vector<8x128xf32> to vector<8xf32>
    %20 = vector.shape_cast %19 : vector<8xf32> to vector<8x1xf32>
    %c0_i32 = arith.constant 0 : i32
    %21 = vector.broadcast %c0_i32 : i32 to vector<8x128xi32>
    %22 = arith.cmpi eq, %11, %21 : vector<8x128xi32>
    %23 = arith.extui %22 : vector<8x128xi1> to vector<8x128xi32>
    %24 = arith.sitofp %23 : vector<8x128xi32> to vector<8x128xf32>
    %25 = vector.broadcast %20 : vector<8x1xf32> to vector<8x128xf32>
    %26 = arith.mulf %25, %24 : vector<8x128xf32>
    %27 = arith.addf %12, %26 : vector<8x128xf32>
    %28 = vector.extract_strided_slice %0 {offsets = [0, 2], sizes = [8, 1], strides = [1, 1]} : vector<8x7xi32> to vector<8x1xi32>
    %29 = vector.broadcast %28 : vector<8x1xi32> to vector<8x128xi32>
    %30 = arith.cmpi eq, %3, %29 : vector<8x128xi32>
    %31 = arith.extui %30 : vector<8x128xi1> to vector<8x128xi32>
    %32 = arith.sitofp %31 : vector<8x128xi32> to vector<8x128xf32>
    %33 = arith.mulf %32, %10 : vector<8x128xf32>
    %cst_8 = arith.constant dense<0.000000e+00> : vector<8xf32>
    %34 = vector.multi_reduction <add>, %33, %cst_8 [1] : vector<8x128xf32> to vector<8xf32>
    %35 = vector.shape_cast %34 : vector<8xf32> to vector<8x1xf32>
    %cst_9 = arith.constant 0.000000e+00 : f32
    %36 = vector.broadcast %cst_9 : f32 to vector<8x1xf32>
    %37 = arith.subf %36, %35 : vector<8x1xf32>
    %c1_i32 = arith.constant 1 : i32
    %38 = vector.broadcast %c1_i32 : i32 to vector<8x128xi32>
    %39 = arith.cmpi eq, %11, %38 : vector<8x128xi32>
    %40 = arith.extui %39 : vector<8x128xi1> to vector<8x128xi32>
    %41 = arith.sitofp %40 : vector<8x128xi32> to vector<8x128xf32>
    %42 = vector.broadcast %37 : vector<8x1xf32> to vector<8x128xf32>
    %43 = arith.mulf %42, %41 : vector<8x128xf32>
    %44 = arith.addf %27, %43 : vector<8x128xf32>
    %45 = vector.extract_strided_slice %0 {offsets = [0, 3], sizes = [8, 1], strides = [1, 1]} : vector<8x7xi32> to vector<8x1xi32>
    %46 = vector.broadcast %45 : vector<8x1xi32> to vector<8x128xi32>
    %47 = arith.cmpi eq, %3, %46 : vector<8x128xi32>
    %48 = arith.extui %47 : vector<8x128xi1> to vector<8x128xi32>
    %49 = arith.sitofp %48 : vector<8x128xi32> to vector<8x128xf32>
    %50 = arith.mulf %49, %10 : vector<8x128xf32>
    %cst_10 = arith.constant dense<0.000000e+00> : vector<8xf32>
    %51 = vector.multi_reduction <add>, %50, %cst_10 [1] : vector<8x128xf32> to vector<8xf32>
    %52 = vector.shape_cast %51 : vector<8xf32> to vector<8x1xf32>
    %cst_11 = arith.constant 0.000000e+00 : f32
    %53 = vector.broadcast %cst_11 : f32 to vector<8x1xf32>
    %54 = arith.subf %53, %52 : vector<8x1xf32>
    %c2_i32 = arith.constant 2 : i32
    %55 = vector.broadcast %c2_i32 : i32 to vector<8x128xi32>
    %56 = arith.cmpi eq, %11, %55 : vector<8x128xi32>
    %57 = arith.extui %56 : vector<8x128xi1> to vector<8x128xi32>
    %58 = arith.sitofp %57 : vector<8x128xi32> to vector<8x128xf32>
    %59 = vector.broadcast %54 : vector<8x1xf32> to vector<8x128xf32>
    %60 = arith.mulf %59, %58 : vector<8x128xf32>
    %61 = arith.addf %44, %60 : vector<8x128xf32>
    %62 = vector.extract_strided_slice %0 {offsets = [0, 4], sizes = [8, 1], strides = [1, 1]} : vector<8x7xi32> to vector<8x1xi32>
    %63 = vector.broadcast %62 : vector<8x1xi32> to vector<8x128xi32>
    %64 = arith.cmpi eq, %3, %63 : vector<8x128xi32>
    %65 = arith.extui %64 : vector<8x128xi1> to vector<8x128xi32>
    %66 = arith.sitofp %65 : vector<8x128xi32> to vector<8x128xf32>
    %67 = arith.mulf %66, %10 : vector<8x128xf32>
    %cst_12 = arith.constant dense<0.000000e+00> : vector<8xf32>
    %68 = vector.multi_reduction <add>, %67, %cst_12 [1] : vector<8x128xf32> to vector<8xf32>
    %69 = vector.shape_cast %68 : vector<8xf32> to vector<8x1xf32>
    %cst_13 = arith.constant 0.000000e+00 : f32
    %70 = vector.broadcast %cst_13 : f32 to vector<8x1xf32>
    %71 = arith.subf %70, %69 : vector<8x1xf32>
    %c3_i32 = arith.constant 3 : i32
    %72 = vector.broadcast %c3_i32 : i32 to vector<8x128xi32>
    %73 = arith.cmpi eq, %11, %72 : vector<8x128xi32>
    %74 = arith.extui %73 : vector<8x128xi1> to vector<8x128xi32>
    %75 = arith.sitofp %74 : vector<8x128xi32> to vector<8x128xf32>
    %76 = vector.broadcast %71 : vector<8x1xf32> to vector<8x128xf32>
    %77 = arith.mulf %76, %75 : vector<8x128xf32>
    %78 = arith.addf %61, %77 : vector<8x128xf32>
    %79 = vector.extract_strided_slice %0 {offsets = [0, 5], sizes = [8, 1], strides = [1, 1]} : vector<8x7xi32> to vector<8x1xi32>
    %80 = vector.broadcast %79 : vector<8x1xi32> to vector<8x128xi32>
    %81 = arith.cmpi eq, %3, %80 : vector<8x128xi32>
    %82 = arith.extui %81 : vector<8x128xi1> to vector<8x128xi32>
    %83 = arith.sitofp %82 : vector<8x128xi32> to vector<8x128xf32>
    %84 = arith.mulf %83, %10 : vector<8x128xf32>
    %cst_14 = arith.constant dense<0.000000e+00> : vector<8xf32>
    %85 = vector.multi_reduction <add>, %84, %cst_14 [1] : vector<8x128xf32> to vector<8xf32>
    %86 = vector.shape_cast %85 : vector<8xf32> to vector<8x1xf32>
    %cst_15 = arith.constant 0.000000e+00 : f32
    %87 = vector.broadcast %cst_15 : f32 to vector<8x1xf32>
    %88 = arith.subf %87, %86 : vector<8x1xf32>
    %c4_i32 = arith.constant 4 : i32
    %89 = vector.broadcast %c4_i32 : i32 to vector<8x128xi32>
    %90 = arith.cmpi eq, %11, %89 : vector<8x128xi32>
    %91 = arith.extui %90 : vector<8x128xi1> to vector<8x128xi32>
    %92 = arith.sitofp %91 : vector<8x128xi32> to vector<8x128xf32>
    %93 = vector.broadcast %88 : vector<8x1xf32> to vector<8x128xf32>
    %94 = arith.mulf %93, %92 : vector<8x128xf32>
    %95 = arith.addf %78, %94 : vector<8x128xf32>
    %96 = vector.extract_strided_slice %0 {offsets = [0, 6], sizes = [8, 1], strides = [1, 1]} : vector<8x7xi32> to vector<8x1xi32>
    %97 = vector.broadcast %96 : vector<8x1xi32> to vector<8x128xi32>
    %98 = arith.cmpi eq, %3, %97 : vector<8x128xi32>
    %99 = arith.extui %98 : vector<8x128xi1> to vector<8x128xi32>
    %100 = arith.sitofp %99 : vector<8x128xi32> to vector<8x128xf32>
    %101 = arith.mulf %100, %10 : vector<8x128xf32>
    %cst_16 = arith.constant dense<0.000000e+00> : vector<8xf32>
    %102 = vector.multi_reduction <add>, %101, %cst_16 [1] : vector<8x128xf32> to vector<8xf32>
    %103 = vector.shape_cast %102 : vector<8xf32> to vector<8x1xf32>
    %cst_17 = arith.constant 0.000000e+00 : f32
    %104 = vector.broadcast %cst_17 : f32 to vector<8x1xf32>
    %105 = arith.subf %104, %103 : vector<8x1xf32>
    %c5_i32 = arith.constant 5 : i32
    %106 = vector.broadcast %c5_i32 : i32 to vector<8x128xi32>
    %107 = arith.cmpi eq, %11, %106 : vector<8x128xi32>
    %108 = arith.extui %107 : vector<8x128xi1> to vector<8x128xi32>
    %109 = arith.sitofp %108 : vector<8x128xi32> to vector<8x128xf32>
    %110 = vector.broadcast %105 : vector<8x1xf32> to vector<8x128xf32>
    %111 = arith.mulf %110, %109 : vector<8x128xf32>
    %112 = arith.addf %95, %111 : vector<8x128xf32>
    %c0_18 = arith.constant 0 : index
    %c0_19 = arith.constant 0 : index
    %113 = vector.load %arg4[%c0_18, %c0_19] : memref<8x128xf32, #tpu.memory_space<vmem>>, vector<8x128xf32>
    tpu.vector_store %arg4[%c0_18, %c0_19], %112 {strides = array<i32>} : memref<8x128xf32, #tpu.memory_space<vmem>>, vector<8x128xf32>,
    return
  }
  func.func @transform_0(%arg0: i32) -> (i32, i32) {
    %c0_i32 = arith.constant 0 : i32
    %c0_i32_0 = arith.constant 0 : i32
    return %arg0, %c0_i32 : i32, i32
  }
  func.func @transform_1(%arg0: i32) -> (i32, i32) {
    %c0_i32 = arith.constant 0 : i32
    %c0_i32_0 = arith.constant 0 : i32
    %c0_i32_1 = arith.constant 0 : i32
    return %c0_i32, %c0_i32_0 : i32, i32
  }
  func.func @transform_2(%arg0: i32) -> (i32, i32) {
    %c0_i32 = arith.constant 0 : i32
    %c0_i32_0 = arith.constant 0 : i32
    %c0_i32_1 = arith.constant 0 : i32
    return %c0_i32, %c0_i32_0 : i32, i32
  }
  func.func @transform_3(%arg0: i32) -> (i32, i32) {
    %c0_i32 = arith.constant 0 : i32
    %c0_i32_0 = arith.constant 0 : i32
    return %arg0, %c0_i32 : i32, i32
  }
}

</mosaic_0001>

<llo_original>
// kernel: tpu_custom_call.1
$region0: #{tpu_custom_call.1}
  #allocation0 [shape = 'u32[]', space=smem, size = 0x4, offset = 0x4, fixed_abs, tag = 'smem constant byte address 0x4 - core index']
  #allocation1 [shape = 'u32[144,128]{1,0:T(1,128)}', space=vmem, size = 0x12000, scoped, tag = 'internal scratch']
  %s0 = inlined_call_operand.hbm [shape: s32[8,7], index: 0, kind: input, shape index: {}]
  %s1 = inlined_call_operand.hbm [shape: f32[128,128], index: 1, kind: input, shape index: {}]
  %s2 = inlined_call_operand.hbm [shape: f32[128,128], index: 2, kind: input, shape index: {}]
  %s3 = inlined_call_operand.hbm [shape: f32[8,128], index: 3, kind: output, shape index: {}]
  %s4 = sld [smem:[#allocation0]]
  $region34: #{tpu_custom_call.1} parent=0
    _
  %s6 = ssub.s32 1, %s4
  %s7 = scalar_select 0, %s6, %s4
  $region1: #{tpu_custom_call.1} parent=0
    #allocation2 [shape = 'u8[4096]{0}', space=vmem, size = 0x1000, scoped, tag = 'input window, operand 0, single buffered']
    #allocation3 [shape = 's32[1]{0}', space=sflag, size = 0x4, scoped, tag = 'scoped memory for tpu_custom_call.1']
    #allocation4 [shape = 's32[1]{0}', space=sflag, size = 0x4, scoped, tag = 'scoped memory for tpu_custom_call.1']
    #allocation5 [shape = 'u8[65536]{0}', space=vmem, size = 0x10000, scoped, tag = 'input window, operand 1, single buffered']
    #allocation6 [shape = 's32[1]{0}', space=sflag, size = 0x4, scoped, tag = 'scoped memory for tpu_custom_call.1']
    #allocation7 [shape = 'u8[65536]{0}', space=vmem, size = 0x10000, scoped, tag = 'input window, operand 2, single buffered']
    #allocation8 [shape = 'u8[4096]{0}', space=vmem, size = 0x1000, scoped, tag = 'output window, operand 0, single buffered']
    %8 = vsyncpa [#allocation3], 0
    %9 = vsyncpa [#allocation6], 0
    %10 = vsyncpa [#allocation4], 0
    // Predicated region
    $region2: #{tpu_custom_call.1} parent=1 // pred_check
      _
    $region3: #{tpu_custom_call.1} parent=1 // pred_check_branch
      %12 = sbr.rel (0) target = $region5
    $region4: #{tpu_custom_call.1} parent=1 // pred_region
      %s14 = ssub.s32 128, 128
      %15 = vsyncadd [#allocation3], %s14
      %s17 = sshll.u32 [#allocation2], 4
      %s18 = int_to_ptr.vmem [resolvable:$true] %s17
      %20 = dma.hbm_to_vmem [thread:$0]  %s0, 128, %s18, [#allocation3]
    $region5: #{tpu_custom_call.1} parent=1 // pred_fallthru
      _
    // Predicated region
    $region6: #{tpu_custom_call.1} parent=1 // pred_check
      _
    $region7: #{tpu_custom_call.1} parent=1 // pred_check_branch
      %22 = sbr.rel (0) target = $region9
    $region8: #{tpu_custom_call.1} parent=1 // pred_region
      %s24 = ssub.s32 2048, 2048
      %25 = vsyncadd [#allocation6], %s24
      %s26 = sshll.u32 [#allocation5], 4
      %s27 = int_to_ptr.vmem [resolvable:$true] %s26
      %32 = dma.hbm_to_vmem [thread:$0]  %s1, 2048, %s27, [#allocation6], 128, 128, 8
    $region9: #{tpu_custom_call.1} parent=1 // pred_fallthru
      _
    // Predicated region
    $region10: #{tpu_custom_call.1} parent=1 // pred_check
      _
    $region11: #{tpu_custom_call.1} parent=1 // pred_check_branch
      %34 = sbr.rel (0) target = $region13
    $region12: #{tpu_custom_call.1} parent=1 // pred_region
      %s36 = ssub.s32 2048, 2048
      %37 = vsyncadd [#allocation6], %s36
      %s38 = sshll.u32 [#allocation7], 4
      %s39 = int_to_ptr.vmem [resolvable:$true] %s38
      %44 = dma.hbm_to_vmem [thread:$0]  %s2, 2048, %s39, [#allocation6], 128, 128, 8
    $region13: #{tpu_custom_call.1} parent=1 // pred_fallthru
      _
    // Predicated region
    $region14: #{tpu_custom_call.1} parent=1 // pred_check
      _
    $region15: #{tpu_custom_call.1} parent=1 // pred_check_branch
      %46 = sbr.rel (0) target = $region17
    $region16: #{tpu_custom_call.1} parent=1 // pred_region
      %47 = dma.done [#allocation3], 128
    $region17: #{tpu_custom_call.1} parent=1 // pred_fallthru
      _
    // Predicated region
    $region18: #{tpu_custom_call.1} parent=1 // pred_check
      _
    $region19: #{tpu_custom_call.1} parent=1 // pred_check_branch
      %49 = sbr.rel (0) target = $region21
    $region20: #{tpu_custom_call.1} parent=1 // pred_region
      %50 = dma.done [#allocation6], 2048
    $region21: #{tpu_custom_call.1} parent=1 // pred_fallthru
      _
    // Predicated region
    $region22: #{tpu_custom_call.1} parent=1 // pred_check
      _
    $region23: #{tpu_custom_call.1} parent=1 // pred_check_branch
      %52 = sbr.rel (0) target = $region25
    $region24: #{tpu_custom_call.1} parent=1 // pred_region
      %53 = dma.done [#allocation6], 2048
    $region25: #{tpu_custom_call.1} parent=1 // pred_fallthru
      _
    %v54 = vld [vmem:[#allocation2] sm:$0xff]
    %v55 = vld [vmem:[#allocation5] sm:$0xff]
    %v56 = vld [vmem:[#allocation5 + $0x8] sm:$0xff]
    %v57 = vld [vmem:[#allocation5 + $0x10] sm:$0xff]
    %v58 = vld [vmem:[#allocation5 + $0x18] sm:$0xff]
    %v59 = vld [vmem:[#allocation5 + $0x20] sm:$0xff]
    %v60 = vld [vmem:[#allocation5 + $0x28] sm:$0xff]
    %v61 = vld [vmem:[#allocation5 + $0x30] sm:$0xff]
    %v62 = vld [vmem:[#allocation5 + $0x38] sm:$0xff]
    %v63 = vld [vmem:[#allocation5 + $0x40] sm:$0xff]
    %v64 = vld [vmem:[#allocation5 + $0x48] sm:$0xff]
    %v65 = vld [vmem:[#allocation5 + $0x50] sm:$0xff]
    %v66 = vld [vmem:[#allocation5 + $0x58] sm:$0xff]
    %v67 = vld [vmem:[#allocation5 + $0x60] sm:$0xff]
    %v68 = vld [vmem:[#allocation5 + $0x68] sm:$0xff]
    %v69 = vld [vmem:[#allocation5 + $0x70] sm:$0xff]
    %v70 = vld [vmem:[#allocation5 + $0x78] sm:$0xff]
    %v71 = vld [vmem:[#allocation7] sm:$0xff]
    %v72 = vld [vmem:[#allocation7 + $0x8] sm:$0xff]
    %v73 = vld [vmem:[#allocation7 + $0x10] sm:$0xff]
    %v74 = vld [vmem:[#allocation7 + $0x18] sm:$0xff]
    %v75 = vld [vmem:[#allocation7 + $0x20] sm:$0xff]
    %v76 = vld [vmem:[#allocation7 + $0x28] sm:$0xff]
    %v77 = vld [vmem:[#allocation7 + $0x30] sm:$0xff]
    %v78 = vld [vmem:[#allocation7 + $0x38] sm:$0xff]
    %v79 = vld [vmem:[#allocation7 + $0x40] sm:$0xff]
    %v80 = vld [vmem:[#allocation7 + $0x48] sm:$0xff]
    %v81 = vld [vmem:[#allocation7 + $0x50] sm:$0xff]
    %v82 = vld [vmem:[#allocation7 + $0x58] sm:$0xff]
    %v83 = vld [vmem:[#allocation7 + $0x60] sm:$0xff]
    %v84 = vld [vmem:[#allocation7 + $0x68] sm:$0xff]
    %v85 = vld [vmem:[#allocation7 + $0x70] sm:$0xff]
    %v86 = vld [vmem:[#allocation7 + $0x78] sm:$0xff]
    %v87 = vlaneseq
    %v88 = vand.u32 %v87, 127
    %89 = vset.pattern.permute.xlu0 0
    %90 = vperm.xlu0 %89, %v54
    %v91 = vpop.permute.xlu0 %90
    %vm92 = vcmp.eq.s32.totalorder %v88, %v91
    %v93 = vsel %vm92, 1, 0
    %v94 = vcvt.s32.f32 %v93
    %95 = vmatprep.subr.mxu0 0.0
    %96 = vmatpush1.msra.mxu0 %v55
    %97 = vmatprep.subr.mxu0 0.0
    %98 = vmatpush1.msra.mxu0 %v56
    %99 = vmatprep.subr.mxu0 0.0
    %100 = vmatpush1.msra.mxu0 %v57
    %101 = vmatprep.subr.mxu0 0.0
    %102 = vmatpush1.msra.mxu0 %v58
    %103 = vmatprep.subr.mxu0 0.0
    %104 = vmatpush1.msra.mxu0 %v59
    %105 = vmatprep.subr.mxu0 0.0
    %106 = vmatpush1.msra.mxu0 %v60
    %107 = vmatprep.subr.mxu0 0.0
    %108 = vmatpush1.msra.mxu0 %v61
    %109 = vmatprep.subr.mxu0 0.0
    %110 = vmatpush1.msra.mxu0 %v62
    %111 = vmatprep.subr.mxu0 0.0
    %112 = vmatpush1.msra.mxu0 %v63
    %113 = vmatprep.subr.mxu0 0.0
    %114 = vmatpush1.msra.mxu0 %v64
    %115 = vmatprep.subr.mxu0 0.0
    %116 = vmatpush1.msra.mxu0 %v65
    %117 = vmatprep.subr.mxu0 0.0
    %118 = vmatpush1.msra.mxu0 %v66
    %119 = vmatprep.subr.mxu0 0.0
    %120 = vmatpush1.msra.mxu0 %v67
    %121 = vmatprep.subr.mxu0 0.0
    %122 = vmatpush1.msra.mxu0 %v68
    %123 = vmatprep.subr.mxu0 0.0
    %124 = vmatpush1.msra.mxu0 %v69
    %125 = vmatprep.subr.mxu0 0.0
    %126 = vmatpush1.msra.mxu0 %v70
    %127 = vmatprep.subr.mxu0 0.0
    %128 = vmatpush1.msra.mxu0 0.0
    %129 = vmatprep.subr.mxu0 0.0
    %130 = vmatpush1.msra.mxu0 0.0
    %131 = vmatprep.subr.mxu0 0.0
    %132 = vmatpush1.msra.mxu0 0.0
    %133 = vmatprep.subr.mxu0 0.0
    %134 = vmatpush1.msra.mxu0 0.0
    %135 = vmatprep.subr.mxu0 0.0
    %136 = vmatpush1.msra.mxu0 0.0
    %137 = vmatprep.subr.mxu0 0.0
    %138 = vmatpush1.msra.mxu0 0.0
    %139 = vmatprep.subr.mxu0 0.0
    %140 = vmatpush1.msra.mxu0 0.0
    %141 = vmatprep.subr.mxu0 0.0
    %142 = vmatpush1.msra.mxu0 0.0
    %143 = vmatprep.subr.mxu0 0.0
    %144 = vmatpush1.msra.mxu0 0.0
    %145 = vmatprep.subr.mxu0 0.0
    %146 = vmatpush1.msra.mxu0 0.0
    %147 = vmatprep.subr.mxu0 0.0
    %148 = vmatpush1.msra.mxu0 0.0
    %149 = vmatprep.subr.mxu0 0.0
    %150 = vmatpush1.msra.mxu0 0.0
    %151 = vmatprep.subr.mxu0 0.0
    %152 = vmatpush1.msra.mxu0 0.0
    %153 = vmatprep.subr.mxu0 0.0
    %154 = vmatpush1.msra.mxu0 0.0
    %155 = vmatprep.subr.mxu0 0.0
    %156 = vmatpush1.msra.mxu0 0.0
    %157 = vmatprep.subr.mxu0 0.0
    %158 = vmatpush1.msra.mxu0 0.0
    %159 = vmatprep.mubr.f32.mxu0 0.0
    %160 = vmatmul.mubr.f32.gmra.mrb[0].mxu0 %v94
    %v161 = vpop.f32.mrb[0].mxu0
    %v162 = vadd.f32 0.0, %v161
    %v163 = vpop.f32.mrb[0].mxu0
    %164 = vdwg.mxu0
    %165 = vmatprep.subr.mxu0 0.0
    %166 = vmatpush1.msra.mxu0 %v71
    %167 = vmatprep.subr.mxu0 0.0
    %168 = vmatpush1.msra.mxu0 %v72
    %169 = vmatprep.subr.mxu0 0.0
    %170 = vmatpush1.msra.mxu0 %v73
    %171 = vmatprep.subr.mxu0 0.0
    %172 = vmatpush1.msra.mxu0 %v74
    %173 = vmatprep.subr.mxu0 0.0
    %174 = vmatpush1.msra.mxu0 %v75
    %175 = vmatprep.subr.mxu0 0.0
    %176 = vmatpush1.msra.mxu0 %v76
    %177 = vmatprep.subr.mxu0 0.0
    %178 = vmatpush1.msra.mxu0 %v77
    %179 = vmatprep.subr.mxu0 0.0
    %180 = vmatpush1.msra.mxu0 %v78
    %181 = vmatprep.subr.mxu0 0.0
    %182 = vmatpush1.msra.mxu0 %v79
    %183 = vmatprep.subr.mxu0 0.0
    %184 = vmatpush1.msra.mxu0 %v80
    %185 = vmatprep.subr.mxu0 0.0
    %186 = vmatpush1.msra.mxu0 %v81
    %187 = vmatprep.subr.mxu0 0.0
    %188 = vmatpush1.msra.mxu0 %v82
    %189 = vmatprep.subr.mxu0 0.0
    %190 = vmatpush1.msra.mxu0 %v83
    %191 = vmatprep.subr.mxu0 0.0
    %192 = vmatpush1.msra.mxu0 %v84
    %193 = vmatprep.subr.mxu0 0.0
    %194 = vmatpush1.msra.mxu0 %v85
    %195 = vmatprep.subr.mxu0 0.0
    %196 = vmatpush1.msra.mxu0 %v86
    %197 = vmatprep.subr.mxu0 0.0
    %198 = vmatpush1.msra.mxu0 0.0
    %199 = vmatprep.subr.mxu0 0.0
    %200 = vmatpush1.msra.mxu0 0.0
    %201 = vmatprep.subr.mxu0 0.0
    %202 = vmatpush1.msra.mxu0 0.0
    %203 = vmatprep.subr.mxu0 0.0
    %204 = vmatpush1.msra.mxu0 0.0
    %205 = vmatprep.subr.mxu0 0.0
    %206 = vmatpush1.msra.mxu0 0.0
    %207 = vmatprep.subr.mxu0 0.0
    %208 = vmatpush1.msra.mxu0 0.0
    %209 = vmatprep.subr.mxu0 0.0
    %210 = vmatpush1.msra.mxu0 0.0
    %211 = vmatprep.subr.mxu0 0.0
    %212 = vmatpush1.msra.mxu0 0.0
    %213 = vmatprep.subr.mxu0 0.0
    %214 = vmatpush1.msra.mxu0 0.0
    %215 = vmatprep.subr.mxu0 0.0
    %216 = vmatpush1.msra.mxu0 0.0
    %217 = vmatprep.subr.mxu0 0.0
    %218 = vmatpush1.msra.mxu0 0.0
    %219 = vmatprep.subr.mxu0 0.0
    %220 = vmatpush1.msra.mxu0 0.0
    %221 = vmatprep.subr.mxu0 0.0
    %222 = vmatpush1.msra.mxu0 0.0
    %223 = vmatprep.subr.mxu0 0.0
    %224 = vmatpush1.msra.mxu0 0.0
    %225 = vmatprep.subr.mxu0 0.0
    %226 = vmatpush1.msra.mxu0 0.0
    %227 = vmatprep.subr.mxu0 0.0
    %228 = vmatpush1.msra.mxu0 0.0
    %229 = vmatprep.mubr.f32.mxu0 0.0
    %230 = vmatmul.mubr.f32.gmra.mrb[0].mxu0 %v162
    %v231 = vpop.f32.mrb[0].mxu0
    %v232 = vadd.f32 0.0, %v231
    %v233 = vpop.f32.mrb[0].mxu0
    %234 = vdwg.mxu0
    %235 = vset.pattern.permute.xlu0 1
    %236 = vperm.xlu0 %235, %v54
    %v237 = vpop.permute.xlu0 %236
    %vm238 = vcmp.eq.s32.totalorder %v88, %v237
    %v239 = vsel %vm238, 1, 0
    %v240 = vcvt.s32.f32 %v239
    %v241 = vmul.f32 %v240, %v232
    %242 = vadd.xlane.f32.xlu0 %v241
    %v243 = vpop.xlane.xlu0 %242
    %vm244 = vcmp.eq.s32.totalorder %v88, 0
    %v245 = vsel %vm244, 1, 0
    %v246 = vcvt.s32.f32 %v245
    %v247 = vmul.f32 %v243, %v246
    %v248 = vadd.f32 %v247, 0.0
    %249 = vset.pattern.permute.xlu0 2
    %250 = vperm.xlu0 %249, %v54
    %v251 = vpop.permute.xlu0 %250
    %vm252 = vcmp.eq.s32.totalorder %v88, %v251
    %v253 = vsel %vm252, 1, 0
    %v254 = vcvt.s32.f32 %v253
    %v255 = vmul.f32 %v254, %v232
    %256 = vadd.xlane.f32.xlu0 %v255
    %v257 = vpop.xlane.xlu0 %256
    %v258 = vsub.f32 0.0, %v257
    %vm259 = vcmp.eq.s32.totalorder %v88, 1
    %v260 = vsel %vm259, 1, 0
    %v261 = vcvt.s32.f32 %v260
    %v262 = vmul.f32 %v258, %v261
    %v263 = vadd.f32 %v248, %v262
    %264 = vset.pattern.permute.xlu0 3
    %265 = vperm.xlu0 %264, %v54
    %v266 = vpop.permute.xlu0 %265
    %vm267 = vcmp.eq.s32.totalorder %v88, %v266
    %v268 = vsel %vm267, 1, 0
    %v269 = vcvt.s32.f32 %v268
    %v270 = vmul.f32 %v269, %v232
    %271 = vadd.xlane.f32.xlu0 %v270
    %v272 = vpop.xlane.xlu0 %271
    %v273 = vsub.f32 0.0, %v272
    %vm274 = vcmp.eq.s32.totalorder %v88, 2
    %v275 = vsel %vm274, 1, 0
    %v276 = vcvt.s32.f32 %v275
    %v277 = vmul.f32 %v273, %v276
    %v278 = vadd.f32 %v263, %v277
    %279 = vset.pattern.permute.xlu0 4
    %280 = vperm.xlu0 %279, %v54
    %v281 = vpop.permute.xlu0 %280
    %vm282 = vcmp.eq.s32.totalorder %v88, %v281
    %v283 = vsel %vm282, 1, 0
    %v284 = vcvt.s32.f32 %v283
    %v285 = vmul.f32 %v284, %v232
    %286 = vadd.xlane.f32.xlu0 %v285
    %v287 = vpop.xlane.xlu0 %286
    %v288 = vsub.f32 0.0, %v287
    %vm289 = vcmp.eq.s32.totalorder %v88, 3
    %v290 = vsel %vm289, 1, 0
    %v291 = vcvt.s32.f32 %v290
    %v292 = vmul.f32 %v288, %v291
    %v293 = vadd.f32 %v278, %v292
    %294 = vset.pattern.permute.xlu0 5
    %295 = vperm.xlu0 %294, %v54
    %v296 = vpop.permute.xlu0 %295
    %vm297 = vcmp.eq.s32.totalorder %v88, %v296
    %v298 = vsel %vm297, 1, 0
    %v299 = vcvt.s32.f32 %v298
    %v300 = vmul.f32 %v299, %v232
    %301 = vadd.xlane.f32.xlu0 %v300
    %v302 = vpop.xlane.xlu0 %301
    %v303 = vsub.f32 0.0, %v302
    %vm304 = vcmp.eq.s32.totalorder %v88, 4
    %v305 = vsel %vm304, 1, 0
    %v306 = vcvt.s32.f32 %v305
    %v307 = vmul.f32 %v303, %v306
    %v308 = vadd.f32 %v293, %v307
    %309 = vset.pattern.permute.xlu0 6
    %310 = vperm.xlu0 %309, %v54
    %v311 = vpop.permute.xlu0 %310
    %vm312 = vcmp.eq.s32.totalorder %v88, %v311
    %v313 = vsel %vm312, 1, 0
    %v314 = vcvt.s32.f32 %v313
    %v315 = vmul.f32 %v314, %v232
    %316 = vadd.xlane.f32.xlu0 %v315
    %v317 = vpop.xlane.xlu0 %316
    %v318 = vsub.f32 0.0, %v317
    %vm319 = vcmp.eq.s32.totalorder %v88, 5
    %v320 = vsel %vm319, 1, 0
    %v321 = vcvt.s32.f32 %v320
    %v322 = vmul.f32 %v318, %v321
    %v323 = vadd.f32 %v308, %v322
    %324 = vst [vmem:[#allocation8] sm:$0xff] %v323
    // Predicated region
    $region26: #{tpu_custom_call.1} parent=1 // pred_check
      _
    $region27: #{tpu_custom_call.1} parent=1 // pred_check_branch
      %326 = sbr.rel (0) target = $region29
    $region28: #{tpu_custom_call.1} parent=1 // pred_region
      %s328 = ssub.s32 128, 128
      %329 = vsyncadd [#allocation4], %s328
      %s331 = sshll.u32 [#allocation8], 4
      %s332 = int_to_ptr.vmem [resolvable:$true] %s331
      %334 = dma.vmem_to_hbm [thread:$0]  %s332, 128, %s3, [#allocation4]
    $region29: #{tpu_custom_call.1} parent=1 // pred_fallthru
      _
    // Predicated region
    $region30: #{tpu_custom_call.1} parent=1 // pred_check
      _
    $region31: #{tpu_custom_call.1} parent=1 // pred_check_branch
      %336 = sbr.rel (0) target = $region33
    $region32: #{tpu_custom_call.1} parent=1 // pred_region
      %337 = dma.done [#allocation4], 128
    $region33: #{tpu_custom_call.1} parent=1 // pred_fallthru
      _
    %338 = vsyncpa [#allocation3], 1
    %339 = vsyncpa [#allocation6], 1
    %340 = vsyncpa [#allocation4], 1

</llo_original>
